<compile_context>
chip_gen: v5e
topology: v5e:2x2
jax: 0.10.0
libtpu: 0.0.40
codegen_flags: <defaults>
</compile_context>

<pallas_src>
import jax
import jax.numpy as jnp
from jax import lax
from jax.experimental import pallas as pl
from jax.experimental.pallas import tpu as pltpu

NORM_EPS = 1e-5


# ---------------------------------------------------------------------------
# Shared LN + modulation body (all math in fp32, biased variance like nn.LayerNorm)
# ---------------------------------------------------------------------------
def _layernorm_modulate(x_ref, o_ref, scale1, shift):
    x = x_ref[...].astype(jnp.float32)
    mean = jnp.mean(x, axis=-1, keepdims=True)
    xc = x - mean
    var = jnp.mean(xc * xc, axis=-1, keepdims=True)            # biased var, like nn.LayerNorm
    xn = xc * lax.rsqrt(var + NORM_EPS)                        # rsqrt -> EUP (free slot)
    o_ref[...] = (xn * scale1 + shift).astype(o_ref.dtype)


# ---------------------------------------------------------------------------
# Fused kernel: SiLU + Linear preamble (tiny, recomputed per step; operands are
# resident constant-index_map VMEM blocks) followed by LayerNorm + modulation.
#   t_ref: (1, D)       embedding row
#   w_ref: (2D, D)      nn.Linear weight in PyTorch (out, in) layout — NOT transposed
#   b_ref: (1, 2D)      bias with +1.0 already folded into the first D entries
#   x_ref: (TN, D)      tile of flattened (B*S, D) tokens
#   o_ref: (TN, D)
# ---------------------------------------------------------------------------
def ada_ln_fused_kernel(t_ref, w_ref, b_ref, x_ref, o_ref):
    d = x_ref.shape[-1]
    t = t_ref[...].astype(jnp.float32)
    t = t * jax.nn.sigmoid(t)                                  # SiLU (exp goes to EUP)
    # Contract on the last dims of both operands -> no materialized weight transpose.
    y = lax.dot_general(
        t, w_ref[...].astype(jnp.float32),
        dimension_numbers=(((1,), (1,)), ((), ())),
        preferred_element_type=jnp.float32,
    ) + b_ref[...]                                             # (1, 2D)
    scale1 = y[:, :d]                                          # (1, D) = (1 + scale)
    shift = y[:, d:]                                           # (1, D)
    _layernorm_modulate(x_ref, o_ref, scale1, shift)


# ---------------------------------------------------------------------------
# Fallback kernel (only for very large D where the weight can't stay resident):
#   mod_ref: (2, D)  row 0 = (1 + scale), row 1 = shift  (broadcast over rows)
# ---------------------------------------------------------------------------
def ada_ln_mod_kernel(mod_ref, x_ref, o_ref):
    m = mod_ref[...]
    _layernorm_modulate(x_ref, o_ref, m[0:1, :], m[1:2, :])


# ---------------------------------------------------------------------------
# Generation-aware VMEM budgets
# ---------------------------------------------------------------------------
def _vmem_budgets():
    try:
        cap = int(pltpu.get_tpu_info().vmem_capacity_bytes)
    except Exception:
        cap = 64 * 1024 * 1024                                 # conservative (v7x-sized)
    if cap <= 64 * 1024 * 1024:
        # v7x: 64 MiB physical per TC -> leave headroom for compiler scratch
        return 24 * 1024 * 1024, 32 * 1024 * 1024
    # v5e / v6e: 128 MiB physical
    return 48 * 1024 * 1024, 64 * 1024 * 1024


# ---------------------------------------------------------------------------
# Tile selection: biggest row tile that (a) fits the double-buffered in+out VMEM
# budget, (b) stays <= 8192 rows, and (c) leaves >= ~8 grid steps so both v7x
# TensorCores get work along the "parallel" axis.
# ---------------------------------------------------------------------------
def _choose_row_tile(n_rows, d, in_itemsize, out_itemsize, tile_budget):
    bytes_per_row = 2 * d * (in_itemsize + out_itemsize)       # 2x = double buffering (in + out)
    tile = tile_budget // max(1, bytes_per_row)
    tile = min(tile, 8192)                                     # ~4 MiB input block at D=128 fp32
    tile = min(tile, pl.cdiv(n_rows, 8))                       # keep >= ~8 grid steps (v7x megacore)
    tile = max(tile, 8)
    if tile >= 16:
        tile = (tile // 16) * 16                               # fine for f32 and bf16 sublane packing
    else:
        tile = 8
    return int(tile)


# ---------------------------------------------------------------------------
# Wrapper
# ---------------------------------------------------------------------------
def ada_layer_norm(x, timestep, emb_weight, lin_weight, lin_bias, *, row_tile=None):
    """
    x:          (B, S, D)
    timestep:   scalar int32 index into the embedding table
    emb_weight: (N_EMB, D)    — nn.Embedding weight
    lin_weight: (2D, D)       — nn.Linear weight (PyTorch layout: out x in)
    lin_bias:   (2D,)         — nn.Linear bias
    """
    B, S, D = x.shape
    out_dim = lin_weight.shape[0]
    assert out_dim == 2 * D

    # --- glue: embedding lookup (single-row gather; no benefit from a Pallas gather) ---
    temb_row = emb_weight[timestep][None, :].astype(jnp.float32)             # (1, D)

    # Fold the "+1" of (1 + scale) into the first half of the bias (tiny vector op).
    bias_mod = lin_bias.astype(jnp.float32).at[:D].add(1.0)[None, :]         # (1, 2D)

    N = B * S
    xf = x.reshape(N, D)
    itemsize = x.dtype.itemsize

    tile_budget, vmem_cap_limit = _vmem_budgets()

    # Resident (constant index_map) operands of the fused kernel.
    w_bytes = lin_weight.size * lin_weight.dtype.itemsize
    resident_fused = w_bytes + bias_mod.size * 4 + temb_row.size * 4
    fuse_temb = resident_fused <= tile_budget // 3

    resident_bytes = resident_fused if fuse_temb else 2 * D * 4
    if row_tile is None:
        row_tile = _choose_row_tile(N, D, itemsize, itemsize,
                                    max(1 << 20, tile_budget - resident_bytes))

    est_vmem = 2 * row_tile * D * (2 * itemsize) + resident_bytes + (2 << 20)
    vmem_limit = int(min(vmem_cap_limit, max(2 * est_vmem, 16 << 20)))

    cost = pl.CostEstimate(
        flops=int(8 * N * D + 2 * D * out_dim),
        transcendentals=int(N + out_dim),
        bytes_accessed=int(2 * N * D * itemsize + resident_bytes),
    )

    grid = (pl.cdiv(N, row_tile),)                             # partial last block handled by Pallas
    x_spec = pl.BlockSpec((row_tile, D), lambda i: (i, 0))
    out_spec = pl.BlockSpec((row_tile, D), lambda i: (i, 0))
    cparams = pltpu.CompilerParams(
        dimension_semantics=("parallel",),
        vmem_limit_bytes=vmem_limit,
    )

    if fuse_temb:
        out = pl.pallas_call(
            ada_ln_fused_kernel,
            out_shape=jax.ShapeDtypeStruct((N, D), x.dtype),
            grid_spec=pltpu.PrefetchScalarGridSpec(
                num_scalar_prefetch=0,
                grid=grid,
                in_specs=[
                    pl.BlockSpec((1, D), lambda i: (0, 0)),          # temb row   (resident)
                    pl.BlockSpec((out_dim, D), lambda i: (0, 0)),    # Linear W   (resident)
                    pl.BlockSpec((1, out_dim), lambda i: (0, 0)),    # bias (+1)  (resident)
                    x_spec,
                ],
                out_specs=out_spec,
            ),
            compiler_params=cparams,
            cost_estimate=cost,
        )(temb_row, lin_weight, bias_mod, xf)
    else:
        # Very large D: keep the 65-KFLOP matvec in plain JAX (one fused XLA op) and
        # pass a single (2, D) broadcast modulation operand to the LN kernel.
        t = temb_row * jax.nn.sigmoid(temb_row)
        mod = (lax.dot_general(
            t, lin_weight.astype(jnp.float32),
            dimension_numbers=(((1,), (1,)), ((), ())),
            preferred_element_type=jnp.float32,
        ) + bias_mod).reshape(2, D)
        out = pl.pallas_call(
            ada_ln_mod_kernel,
            out_shape=jax.ShapeDtypeStruct((N, D), x.dtype),
            grid_spec=pltpu.PrefetchScalarGridSpec(
                num_scalar_prefetch=0,
                grid=grid,
                in_specs=[
                    pl.BlockSpec((2, D), lambda i: (0, 0)),          # (1+scale, shift) resident
                    x_spec,
                ],
                out_specs=out_spec,
            ),
            compiler_params=cparams,
            cost_estimate=cost,
        )(mod, xf)

    return out.reshape(B, S, D)


# ---------------------------------------------------------------------------
# Pure-JAX reference (for correctness check)
# ---------------------------------------------------------------------------
def ada_layer_norm_ref(x, timestep, emb_weight, lin_weight, lin_bias):
    D = emb_weight.shape[1]
    temb = emb_weight[timestep]
    temb = temb * jax.nn.sigmoid(temb)
    temb = temb @ lin_weight.T + lin_bias
    scale, shift = temb[:D], temb[D:]
    mean = jnp.mean(x, axis=-1, keepdims=True)
    var = jnp.mean((x - mean) ** 2, axis=-1, keepdims=True)
    xn = (x - mean) / jnp.sqrt(var + NORM_EPS)
    return xn * (1.0 + scale) + shift


if __name__ == "__main__":
    key = jax.random.PRNGKey(0)
    k_x, k_x2, k_emb, k_w, k_b = jax.random.split(key, 5)

    D = 128                      # lane-dense last dim (multiple of 128)
    N_EMB = 16
    timestep = jnp.int32(3)

    # Deterministic synthetic parameters (shapes from the module __init__)
    emb_weight = jax.random.normal(k_emb, (N_EMB, D), dtype=jnp.float32)        # nn.Embedding
    lin_weight = 0.05 * jax.random.normal(k_w, (2 * D, D), dtype=jnp.float32)   # nn.Linear weight
    lin_bias = 0.05 * jax.random.normal(k_b, (2 * D,), dtype=jnp.float32)       # nn.Linear bias

    # Case 1: token count divisible by the chosen row tile.
    B, S = 2, 64
    x = jax.random.normal(k_x, (B, S, D), dtype=jnp.float32)
    out = jax.block_until_ready(ada_layer_norm(x, timestep, emb_weight, lin_weight, lin_bias))
    ref = ada_layer_norm_ref(x, timestep, emb_weight, lin_weight, lin_bias)
    assert out.shape == (B, S, D)
    assert jnp.allclose(out, ref, atol=1e-5, rtol=1e-5), "mismatch vs reference (divisible case)"

    # Case 2: token count NOT divisible by the row tile (exercises the cdiv/tail path).
    B2, S2 = 3, 37               # N = 111
    x2 = jax.random.normal(k_x2, (B2, S2, D), dtype=jnp.float32)
    out2 = jax.block_until_ready(ada_layer_norm(x2, timestep, emb_weight, lin_weight, lin_bias))
    ref2 = ada_layer_norm_ref(x2, timestep, emb_weight, lin_weight, lin_bias)
    assert out2.shape == (B2, S2, D)
    assert jnp.allclose(out2, ref2, atol=1e-5, rtol=1e-5), "mismatch vs reference (tail case)"

    print("KERNEL_OK")
</pallas_src>

<mosaic_0001>
module attributes {stable_mosaic.version = 11 : i64} {
  func.func @ada_ln_fused_kernel(%arg0: i32, %arg1: memref<1x128xf32, #tpu.memory_space<vmem>>, %arg2: memref<256x128xf32, #tpu.memory_space<vmem>>, %arg3: memref<1x256xf32, #tpu.memory_space<vmem>>, %arg4: memref<16x128xf32, #tpu.memory_space<vmem>>, %arg5: memref<16x128xf32, #tpu.memory_space<vmem>>) attributes {dimension_semantics = [#tpu.dimension_semantics<parallel>], iteration_bounds = array<i64: 8>, scalar_prefetch = 0 : i64, scratch_operands = 0 : i64, tpu.core_type = #tpu.core_type<tc>, window_params = [{pipeline_mode = #tpu.pipeline_mode<synchronous>, transform_indices = @transform_0, window_bounds = array<i64: 1, 128>}, {pipeline_mode = #tpu.pipeline_mode<synchronous>, transform_indices = @transform_1, window_bounds = array<i64: 256, 128>}, {pipeline_mode = #tpu.pipeline_mode<synchronous>, transform_indices = @transform_2, window_bounds = array<i64: 1, 256>}, {transform_indices = @transform_3, window_bounds = array<i64: 16, 128>}, {transform_indices = @transform_4, window_bounds = array<i64: 16, 128>}]} {
    %c0 = arith.constant 0 : index
    %c0_0 = arith.constant 0 : index
    %0 = vector.load %arg1[%c0, %c0_0] : memref<1x128xf32, #tpu.memory_space<vmem>>, vector<1x128xf32>
    %1 = arith.negf %0 : vector<1x128xf32>
    %2 = math.exp %1 : vector<1x128xf32>
    %cst = arith.constant 1.000000e+00 : f32
    %3 = vector.broadcast %cst : f32 to vector<1x128xf32>
    %4 = arith.addf %3, %2 : vector<1x128xf32>
    %5 = arith.divf %3, %4 : vector<1x128xf32>
    %6 = arith.mulf %0, %5 : vector<1x128xf32>
    %c0_1 = arith.constant 0 : index
    %c0_2 = arith.constant 0 : index
    %7 = vector.load %arg2[%c0_1, %c0_2] : memref<256x128xf32, #tpu.memory_space<vmem>>, vector<256x128xf32>
    %cst_3 = arith.constant dense<0.000000e+00> : vector<1x256xf32>
    %8 = tpu.matmul %6, %7, %cst_3 {dimension_numbers = #tpu.dot_dimension_numbers<[1], [1], [0], [0], [0, 0, 1, 0], [], []>} : vector<1x128xf32>, vector<256x128xf32>, vector<1x256xf32> -> vector<1x256xf32>
    %c0_4 = arith.constant 0 : index
    %c0_5 = arith.constant 0 : index
    %9 = vector.load %arg3[%c0_4, %c0_5] : memref<1x256xf32, #tpu.memory_space<vmem>>, vector<1x256xf32>
    %10 = arith.addf %8, %9 : vector<1x256xf32>
    %11 = vector.extract_strided_slice %10 {offsets = [0, 0], sizes = [1, 128], strides = [1, 1]} : vector<1x256xf32> to vector<1x128xf32>
    %12 = vector.extract_strided_slice %10 {offsets = [0, 128], sizes = [1, 128], strides = [1, 1]} : vector<1x256xf32> to vector<1x128xf32>
    %c0_6 = arith.constant 0 : index
    %c0_7 = arith.constant 0 : index
    %13 = vector.load %arg4[%c0_6, %c0_7] : memref<16x128xf32, #tpu.memory_space<vmem>>, vector<16x128xf32>
    %cst_8 = arith.constant dense<0.000000e+00> : vector<16xf32>
    %14 = vector.multi_reduction <add>, %13, %cst_8 [1] : vector<16x128xf32> to vector<16xf32>
    %15 = vector.shape_cast %14 : vector<16xf32> to vector<16x1xf32>
    %cst_9 = arith.constant 1.280000e+02 : f32
    %16 = vector.broadcast %cst_9 : f32 to vector<16x1xf32>
    %17 = arith.divf %15, %16 : vector<16x1xf32>
    %18 = vector.broadcast %17 : vector<16x1xf32> to vector<16x128xf32>
    %19 = arith.subf %13, %18 : vector<16x128xf32>
    %20 = arith.mulf %19, %19 : vector<16x128xf32>
    %cst_10 = arith.constant dense<0.000000e+00> : vector<16xf32>
    %21 = vector.multi_reduction <add>, %20, %cst_10 [1] : vector<16x128xf32> to vector<16xf32>
    %22 = vector.shape_cast %21 : vector<16xf32> to vector<16x1xf32>
    %cst_11 = arith.constant 1.280000e+02 : f32
    %23 = vector.broadcast %cst_11 : f32 to vector<16x1xf32>
    %24 = arith.divf %22, %23 : vector<16x1xf32>
    %cst_12 = arith.constant 9.99999974E-6 : f32
    %25 = vector.broadcast %cst_12 : f32 to vector<16x1xf32>
    %26 = arith.addf %24, %25 : vector<16x1xf32>
    %27 = math.rsqrt %26 : vector<16x1xf32>
    %28 = vector.broadcast %27 : vector<16x1xf32> to vector<16x128xf32>
    %29 = arith.mulf %19, %28 : vector<16x128xf32>
    %30 = vector.broadcast %11 : vector<1x128xf32> to vector<16x128xf32>
    %31 = arith.mulf %29, %30 : vector<16x128xf32>
    %32 = vector.broadcast %12 : vector<1x128xf32> to vector<16x128xf32>
    %33 = arith.addf %31, %32 : vector<16x128xf32>
    %c0_13 = arith.constant 0 : index
    %c0_14 = arith.constant 0 : index
    %34 = vector.load %arg5[%c0_13, %c0_14] : memref<16x128xf32, #tpu.memory_space<vmem>>, vector<16x128xf32>
    tpu.vector_store %arg5[%c0_13, %c0_14], %33 {strides = array<i32>} : memref<16x128xf32, #tpu.memory_space<vmem>>, vector<16x128xf32>,
    return
  }
  func.func @transform_0(%arg0: i32) -> (i32, i32) {
    %c0_i32 = arith.constant 0 : i32
    %c0_i32_0 = arith.constant 0 : i32
    %c0_i32_1 = arith.constant 0 : i32
    return %c0_i32, %c0_i32_0 : i32, i32
  }
  func.func @transform_1(%arg0: i32) -> (i32, i32) {
    %c0_i32 = arith.constant 0 : i32
    %c0_i32_0 = arith.constant 0 : i32
    %c0_i32_1 = arith.constant 0 : i32
    return %c0_i32, %c0_i32_0 : i32, i32
  }
  func.func @transform_2(%arg0: i32) -> (i32, i32) {
    %c0_i32 = arith.constant 0 : i32
    %c0_i32_0 = arith.constant 0 : i32
    %c0_i32_1 = arith.constant 0 : i32
    return %c0_i32, %c0_i32_0 : i32, i32
  }
  func.func @transform_3(%arg0: i32) -> (i32, i32) {
    %c0_i32 = arith.constant 0 : i32
    %c0_i32_0 = arith.constant 0 : i32
    return %arg0, %c0_i32 : i32, i32
  }
  func.func @transform_4(%arg0: i32) -> (i32, i32) {
    %c0_i32 = arith.constant 0 : i32
    %c0_i32_0 = arith.constant 0 : i32
    return %arg0, %c0_i32 : i32, i32
  }
}

</mosaic_0001>

<llo_original>
// kernel: tpu_custom_call.1
$region0: #{tpu_custom_call.1}
  #allocation0 [shape = 'u32[]', space=smem, size = 0x4, offset = 0x4, fixed_abs, tag = 'smem constant byte address 0x4 - core index']
  #allocation1 [shape = 'u32[72,128]{1,0:T(1,128)}', space=vmem, size = 0x9000, scoped, tag = 'internal scratch']
  %s0 = inlined_call_operand.hbm [shape: f32[1,128], index: 0, kind: input, shape index: {}]
  %s1 = inlined_call_operand.hbm [shape: f32[256,128], index: 1, kind: input, shape index: {}]
  %s2 = inlined_call_operand.hbm [shape: f32[1,256], index: 2, kind: input, shape index: {}]
  %s3 = inlined_call_operand.hbm [shape: f32[128,128], index: 3, kind: input, shape index: {}]
  %s4 = inlined_call_operand.hbm [shape: f32[128,128], index: 4, kind: output, shape index: {}]
  %s5 = sld [smem:[#allocation0]]
  $region65: #{tpu_custom_call.1} parent=0
    _
  %s7 = ssub.s32 1, %s5
  %s8 = scalar_select 0, %s7, %s5
  $region1: #{tpu_custom_call.1} parent=0
    #allocation2 [shape = 'u8[512]{0}', space=vmem, size = 0x400, scoped, tag = 'input window, operand 0, single buffered']
    #allocation3 [shape = 's32[2]{0}', space=sflag, size = 0x8, scoped, tag = 'scoped memory for tpu_custom_call.1']
    #allocation4 [shape = 's32[2]{0}', space=sflag, size = 0x8, scoped, tag = 'scoped memory for tpu_custom_call.1']
    #allocation5 [shape = 'u8[131072]{0}', space=vmem, size = 0x20000, scoped, tag = 'input window, operand 1, single buffered']
    #allocation6 [shape = 's32[1]{0}', space=sflag, size = 0x4, scoped, tag = 'scoped memory for tpu_custom_call.1']
    #allocation7 [shape = 'u8[1024]{0}', space=vmem, size = 0x400, scoped, tag = 'input window, operand 2, single buffered']
    #allocation8 [shape = 'u8[16384]{0}', space=vmem, size = 0x4000, scoped, tag = 'input window, operand 3']
    #allocation9 [shape = 's32[2]{0}', space=sflag, size = 0x8, scoped, tag = 'scoped memory for tpu_custom_call.1']
    #allocation10 [shape = 'u8[16384]{0}', space=vmem, size = 0x4000, scoped, tag = 'output window, operand 0']
    %9 = vsyncpa [#allocation3], 0
    %10 = vsyncpa [#allocation6], 0
    %11 = vsyncpa [#allocation9], 0
    %s12 = scalar_lea.sflag [#allocation9], 1
    %13 = vsyncpa %s12, 0
    %14 = vsyncpa [#allocation4], 0
    %s15 = scalar_lea.sflag [#allocation4], 1
    %16 = vsyncpa %s15, 0
    loop: start=0, step=1, limit=10
    $region2: #{tpu_custom_call.1} parent=1 // loop_pre_header
      _
    $region3: #{tpu_custom_call.1} parent=1 // loop_header
      %s18 = sphi 0, %s22
      %p19 = scmp.ge.s32.totalorder %s18, 10
      %s26 = sphi 0, %s26
      %s28 = sphi 0, %s26
      %s29 = sphi 0, %s28
      %s43 = sphi 0, %s29
      %s47 = sphi 0, %s47
      %s49 = sphi 0, %s47
      %s50 = sphi 0, %s49
      %s64 = sphi 0, %s50
      %s68 = sphi 0, %s68
      %s70 = sphi 0, %s68
      %s71 = sphi 0, %s70
      %s85 = sphi 0, %s71
      %s91 = sphi 0, %s93
      %s94 = sphi 0, %s91
      %s95 = sphi 0, %s94
      %s111 = sphi 0, %s95
      %s117 = sphi 0, %s119
      %s120 = sphi 0, %s117
      %s121 = sphi 0, %s120
      %s137 = sphi 0, %s121
    $region4: #{tpu_custom_call.1} parent=1 // loop_header_branch
      %21 = sbr.rel (%p19) target = $region8
    $region5: #{tpu_custom_call.1} parent=1 // loop_body
      %s23 = ssub.s32 %s18, 1
      %s24 = ssub.s32 %s18, 2
      %s25 = sadd.s32 %s18, 1
      %s27 = sadd.s32 %s26, 1
      %p30 = scmp.eq.s32.totalorder %s18, 7
      %p31 = scmp.ne.s32.totalorder %s26, %s28
      %p32 = scmp.eq.s32.totalorder %s18, 0
      %p33 = por %p31, %p32
      %p34 = scmp.ne.s32.totalorder %s26, %s28
      %p35 = scmp.eq.s32.totalorder %s23, 7
      %p36 = por %p34, %p35
      %p37 = scmp.ne.s32.totalorder %s28, %s29
      %p38 = scmp.eq.s32.totalorder %s23, 0
      %p39 = por %p37, %p38
      %p40 = scmp.ne.s32.totalorder %s28, %s29
      %p41 = scmp.eq.s32.totalorder %s24, 7
      %p42 = por %p40, %p41
      %p44 = scmp.ne.s32.totalorder %s29, %s43
      %p45 = scmp.eq.s32.totalorder %s24, 0
      %p46 = por %p44, %p45
      %s48 = sadd.s32 %s47, 1
      %p51 = scmp.eq.s32.totalorder %s18, 7
      %p52 = scmp.ne.s32.totalorder %s47, %s49
      %p53 = scmp.eq.s32.totalorder %s18, 0
      %p54 = por %p52, %p53
      %p55 = scmp.ne.s32.totalorder %s47, %s49
      %p56 = scmp.eq.s32.totalorder %s23, 7
      %p57 = por %p55, %p56
      %p58 = scmp.ne.s32.totalorder %s49, %s50
      %p59 = scmp.eq.s32.totalorder %s23, 0
      %p60 = por %p58, %p59
      %p61 = scmp.ne.s32.totalorder %s49, %s50
      %p62 = scmp.eq.s32.totalorder %s24, 7
      %p63 = por %p61, %p62
      %p65 = scmp.ne.s32.totalorder %s50, %s64
      %p66 = scmp.eq.s32.totalorder %s24, 0
      %p67 = por %p65, %p66
      %s69 = sadd.s32 %s68, 1
      %p72 = scmp.eq.s32.totalorder %s18, 7
      %p73 = scmp.ne.s32.totalorder %s68, %s70
      %p74 = scmp.eq.s32.totalorder %s18, 0
      %p75 = por %p73, %p74
      %p76 = scmp.ne.s32.totalorder %s68, %s70
      %p77 = scmp.eq.s32.totalorder %s23, 7
      %p78 = por %p76, %p77
      %p79 = scmp.ne.s32.totalorder %s70, %s71
      %p80 = scmp.eq.s32.totalorder %s23, 0
      %p81 = por %p79, %p80
      %p82 = scmp.ne.s32.totalorder %s70, %s71
      %p83 = scmp.eq.s32.totalorder %s24, 7
      %p84 = por %p82, %p83
      %p86 = scmp.ne.s32.totalorder %s71, %s85
      %p87 = scmp.eq.s32.totalorder %s24, 0
      %p88 = por %p86, %p87
      %s89 = ssub.s32 %s18, %s25
      %p90 = scmp.eq.s32.totalorder %s89, 0
      %s92 = sadd.s32 %s91, 1
      %s93 = scalar_select %p90, %s91, %s92
      %p96 = pneg %p90
      %p97 = scmp.eq.s32.totalorder %s18, 7
      %p98 = por %p96, %p97
      %p99 = scmp.ne.s32.totalorder %s91, %s94
      %p100 = scmp.eq.s32.totalorder %s18, 0
      %p101 = por %p99, %p100
      %p102 = scmp.ne.s32.totalorder %s91, %s94
      %p103 = scmp.eq.s32.totalorder %s23, 7
      %p104 = por %p102, %p103
      %p105 = scmp.ne.s32.totalorder %s94, %s95
      %p106 = scmp.eq.s32.totalorder %s23, 0
      %p107 = por %p105, %p106
      %p108 = scmp.ne.s32.totalorder %s94, %s95
      %p109 = scmp.eq.s32.totalorder %s24, 7
      %p110 = por %p108, %p109
      %p112 = scmp.ne.s32.totalorder %s95, %s111
      %p113 = scmp.eq.s32.totalorder %s24, 0
      %p114 = por %p112, %p113
      %s115 = ssub.s32 %s18, %s25
      %p116 = scmp.eq.s32.totalorder %s115, 0
      %s118 = sadd.s32 %s117, 1
      %s119 = scalar_select %p116, %s117, %s118
      %p122 = pneg %p116
      %p123 = scmp.eq.s32.totalorder %s18, 7
      %p124 = por %p122, %p123
      %p125 = scmp.ne.s32.totalorder %s117, %s120
      %p126 = scmp.eq.s32.totalorder %s18, 0
      %p127 = por %p125, %p126
      %p128 = scmp.ne.s32.totalorder %s117, %s120
      %p129 = scmp.eq.s32.totalorder %s23, 7
      %p130 = por %p128, %p129
      %p131 = scmp.ne.s32.totalorder %s120, %s121
      %p132 = scmp.eq.s32.totalorder %s23, 0
      %p133 = por %p131, %p132
      %p134 = scmp.ne.s32.totalorder %s120, %s121
      %p135 = scmp.eq.s32.totalorder %s24, 7
      %p136 = por %p134, %p135
      %p138 = scmp.ne.s32.totalorder %s121, %s137
      %p139 = scmp.eq.s32.totalorder %s24, 0
      %p140 = por %p138, %p139
      %p141 = scmp.le.s32.totalorder 1, %s18
      %p142 = scmp.lt.s32.totalorder %s18, 9
      %p143 = pnand %p141, %p142
      %p144 = pneg %p143
      // Predicated region
      $region9: #{tpu_custom_call.1} parent=5 // pred_check
        _
      $region10: #{tpu_custom_call.1} parent=5 // pred_check_branch
        %146 = sbr.rel (%p143) target = $region12
      $region11: #{tpu_custom_call.1} parent=5 // pred_region
        %s147 = ssub.s32 %s18, 1
        // Predicated region
        $region13: #{tpu_custom_call.1} parent=11 // pred_check
          %p148 = pneg %p39
        $region14: #{tpu_custom_call.1} parent=11 // pred_check_branch
          %150 = sbr.rel (%p148) target = $region16
        $region15: #{tpu_custom_call.1} parent=11 // pred_region
          %152 = vsyncadd [#allocation3], 0
          %s154 = sshll.u32 %s0, 4
          %s155 = int_to_ptr.hbm [resolvable:$true] %s154
          %s156 = sshll.u32 [#allocation2], 4
          %s157 = int_to_ptr.vmem [resolvable:$true] %s156
          %159 = dma.hbm_to_vmem [thread:$0]  %s155, 16, %s157, [#allocation3]
        $region16: #{tpu_custom_call.1} parent=11 // pred_fallthru
          _
        // Predicated region
        $region17: #{tpu_custom_call.1} parent=11 // pred_check
          %p160 = pneg %p60
        $region18: #{tpu_custom_call.1} parent=11 // pred_check_branch
          %162 = sbr.rel (%p160) target = $region20
        $region19: #{tpu_custom_call.1} parent=11 // pred_region
          %164 = vsyncadd [#allocation6], 0
          %s165 = sshll.u32 %s1, 4
          %s166 = int_to_ptr.hbm [resolvable:$true] %s165
          %s167 = sshll.u32 [#allocation5], 4
          %s168 = int_to_ptr.vmem [resolvable:$true] %s167
          %173 = dma.hbm_to_vmem [thread:$0]  %s166, 4096, %s168, [#allocation6], 128, 128, 8
        $region20: #{tpu_custom_call.1} parent=11 // pred_fallthru
          _
        // Predicated region
        $region21: #{tpu_custom_call.1} parent=11 // pred_check
          %p174 = pneg %p81
        $region22: #{tpu_custom_call.1} parent=11 // pred_check_branch
          %176 = sbr.rel (%p174) target = $region24
        $region23: #{tpu_custom_call.1} parent=11 // pred_region
          %178 = vsyncadd [#allocation6], 0
          %s180 = sshll.u32 %s2, 4
          %s181 = int_to_ptr.hbm [resolvable:$true] %s180
          %s182 = sshll.u32 [#allocation7], 4
          %s183 = int_to_ptr.vmem [resolvable:$true] %s182
          %185 = dma.hbm_to_vmem [thread:$0]  %s181, 32, %s183, [#allocation6]
        $region24: #{tpu_custom_call.1} parent=11 // pred_fallthru
          _
      $region12: #{tpu_custom_call.1} parent=5 // pred_fallthru
        _
      %p186 = scmp.lt.s32.totalorder %s18, 8
      // Predicated region
      $region25: #{tpu_custom_call.1} parent=5 // pred_check
        %p187 = pneg %p186
      $region26: #{tpu_custom_call.1} parent=5 // pred_check_branch
        %189 = sbr.rel (%p187) target = $region28
      $region27: #{tpu_custom_call.1} parent=5 // pred_region
        // Predicated region
        $region29: #{tpu_custom_call.1} parent=27 // pred_check
          %p190 = pneg %p101
        $region30: #{tpu_custom_call.1} parent=27 // pred_check_branch
          %192 = sbr.rel (%p190) target = $region32
        $region31: #{tpu_custom_call.1} parent=27 // pred_region
          %s193 = sand.u32 %s91, 1
          %s194 = scalar_lea.sflag [#allocation9], %s193
          %s195 = sand.u32 %s91, 1
          %s196 = smul.addr %s195, 16
          %s197 = scalar_lea.vmem [#allocation8], %s196
          %s198 = smul.u32 2, %s18
          %200 = vsyncadd %s194, 0
          %s201 = smul.addr %s198, 8
          %s202 = scalar_lea.hbm %s3, %s201
          %s203 = sshll.u32 %s202, 4
          %s204 = int_to_ptr.hbm [resolvable:$true] %s203
          %s205 = sshll.u32 %s197, 4
          %s206 = int_to_ptr.vmem [resolvable:$true] %s205
          %211 = dma.hbm_to_vmem [thread:$0]  %s204, 256, %s206, %s194, 128, 128, 8
        $region32: #{tpu_custom_call.1} parent=27 // pred_fallthru
          _
      $region28: #{tpu_custom_call.1} parent=5 // pred_fallthru
        _
      %p212 = scmp.le.s32.totalorder 1, %s18
      %p213 = scmp.lt.s32.totalorder %s18, 9
      %p214 = pnand %p212, %p213
      %p215 = pneg %p214
      // Predicated region
      $region33: #{tpu_custom_call.1} parent=5 // pred_check
        _
      $region34: #{tpu_custom_call.1} parent=5 // pred_check_branch
        %217 = sbr.rel (%p214) target = $region36
      $region35: #{tpu_custom_call.1} parent=5 // pred_region
        %s218 = ssub.s32 %s18, 1
        // Predicated region
        $region37: #{tpu_custom_call.1} parent=35 // pred_check
          %p219 = pneg %p39
        $region38: #{tpu_custom_call.1} parent=35 // pred_check_branch
          %221 = sbr.rel (%p219) target = $region40
        $region39: #{tpu_custom_call.1} parent=35 // pred_region
          %223 = dma.done [#allocation3], 16
        $region40: #{tpu_custom_call.1} parent=35 // pred_fallthru
          _
        // Predicated region
        $region41: #{tpu_custom_call.1} parent=35 // pred_check
          %p224 = pneg %p60
        $region42: #{tpu_custom_call.1} parent=35 // pred_check_branch
          %226 = sbr.rel (%p224) target = $region44
        $region43: #{tpu_custom_call.1} parent=35 // pred_region
          %228 = dma.done [#allocation6], 4096
        $region44: #{tpu_custom_call.1} parent=35 // pred_fallthru
          _
        // Predicated region
        $region45: #{tpu_custom_call.1} parent=35 // pred_check
          %p229 = pneg %p81
        $region46: #{tpu_custom_call.1} parent=35 // pred_check_branch
          %231 = sbr.rel (%p229) target = $region48
        $region47: #{tpu_custom_call.1} parent=35 // pred_region
          %233 = dma.done [#allocation6], 32
        $region48: #{tpu_custom_call.1} parent=35 // pred_fallthru
          _
        %s234 = sand.u32 %s94, 1
        %s235 = scalar_lea.sflag [#allocation9], %s234
        %s236 = sand.u32 %s94, 1
        %s237 = smul.addr %s236, 16
        %s238 = scalar_lea.vmem [#allocation8], %s237
        // Predicated region
        $region49: #{tpu_custom_call.1} parent=35 // pred_check
          %p239 = pneg %p107
        $region50: #{tpu_custom_call.1} parent=35 // pred_check_branch
          %241 = sbr.rel (%p239) target = $region52
        $region51: #{tpu_custom_call.1} parent=35 // pred_region
          %243 = dma.done %s235, 256
        $region52: #{tpu_custom_call.1} parent=35 // pred_fallthru
          _
        %p244 = pneg %p39
        %p245 = pneg %p36
        %p246 = pneg %p60
        %p247 = pneg %p57
        %p248 = pneg %p81
        %p249 = pneg %p78
        %s250 = sand.u32 %s94, 1
        %s251 = scalar_lea.sflag [#allocation9], %s250
        %s252 = sand.u32 %s94, 1
        %s253 = smul.addr %s252, 16
        %s254 = scalar_lea.vmem [#allocation8], %s253
        %p255 = pneg %p107
        %p256 = pneg %p104
        %p257 = pneg %p133
        %p258 = pneg %p130
        %s259 = sand.u32 %s120, 1
        %s260 = scalar_lea.sflag [#allocation4], %s259
        %s261 = sand.u32 %s120, 1
        %s262 = smul.addr %s261, 16
        %s263 = scalar_lea.vmem [#allocation10], %s262
        %s264 = smul.u32 2, %s23
        %s265 = smul.u32 2, %s23
        %v266 = vld [vmem:[#allocation2] sm:$0x1]
        %v267 = vxor.u32 %v266, 2147483648
        %v268 = vmul.f32 %v267, 1.442695
        %v269 = vpow.pop %v268
        %v270 = vadd.f32 %v269, 1.0
        %v271 = vrcp.pop %v270
        %v272 = vmul.f32 %v270, %v271
        %v273 = vsub.f32 1.0, %v272
        %v274 = vmul.f32 %v271, %v273
        %v275 = vadd.f32 %v271, %v274
        %vm276 = vweird.f32 %v270
        %vm277 = vweird.f32 %v271
        %vm278 = vmor %vm276, %vm277
        %v279 = vsel %vm278, %v271, %v275
        %v280 = vand.u32 2147483647, %v270
        %vm281 = vcmp.eq.f32.partialorder %v280, 8.507059e+37
        %v282 = vand.u32 %v270, 2147483648
        %v283 = vor.u32 1.1754944e-38, %v282
        %v284 = vsel %vm281, %v283, %v279
        %v285 = vmul.f32 1.0, %v284
        %v286 = vmul.f32 %v266, %v285
        %v287 = vld [vmem:[#allocation5] sm:$0xff]
        %v288 = vld [vmem:[#allocation5 + $0x8] sm:$0xff]
        %v289 = vld [vmem:[#allocation5 + $0x10] sm:$0xff]
        %v290 = vld [vmem:[#allocation5 + $0x18] sm:$0xff]
        %v291 = vld [vmem:[#allocation5 + $0x20] sm:$0xff]
        %v292 = vld [vmem:[#allocation5 + $0x28] sm:$0xff]
        %v293 = vld [vmem:[#allocation5 + $0x30] sm:$0xff]
        %v294 = vld [vmem:[#allocation5 + $0x38] sm:$0xff]
        %v295 = vld [vmem:[#allocation5 + $0x40] sm:$0xff]
        %v296 = vld [vmem:[#allocation5 + $0x48] sm:$0xff]
        %v297 = vld [vmem:[#allocation5 + $0x50] sm:$0xff]
        %v298 = vld [vmem:[#allocation5 + $0x58] sm:$0xff]
        %v299 = vld [vmem:[#allocation5 + $0x60] sm:$0xff]
        %v300 = vld [vmem:[#allocation5 + $0x68] sm:$0xff]
        %v301 = vld [vmem:[#allocation5 + $0x70] sm:$0xff]
        %v302 = vld [vmem:[#allocation5 + $0x78] sm:$0xff]
        %v303 = vld [vmem:[#allocation5 + $0x80] sm:$0xff]
        %v304 = vld [vmem:[#allocation5 + $0x88] sm:$0xff]
        %v305 = vld [vmem:[#allocation5 + $0x90] sm:$0xff]
        %v306 = vld [vmem:[#allocation5 + $0x98] sm:$0xff]
        %v307 = vld [vmem:[#allocation5 + $0xa0] sm:$0xff]
        %v308 = vld [vmem:[#allocation5 + $0xa8] sm:$0xff]
        %v309 = vld [vmem:[#allocation5 + $0xb0] sm:$0xff]
        %v310 = vld [vmem:[#allocation5 + $0xb8] sm:$0xff]
        %v311 = vld [vmem:[#allocation5 + $0xc0] sm:$0xff]
        %v312 = vld [vmem:[#allocation5 + $0xc8] sm:$0xff]
        %v313 = vld [vmem:[#allocation5 + $0xd0] sm:$0xff]
        %v314 = vld [vmem:[#allocation5 + $0xd8] sm:$0xff]
        %v315 = vld [vmem:[#allocation5 + $0xe0] sm:$0xff]
        %v316 = vld [vmem:[#allocation5 + $0xe8] sm:$0xff]
        %v317 = vld [vmem:[#allocation5 + $0xf0] sm:$0xff]
        %v318 = vld [vmem:[#allocation5 + $0xf8] sm:$0xff]
        %v319 = vld [vmem:[#allocation7] sm:$0x3]
        %v321 = vperm.slane %v319, 0
        %v322 = vperm.slane %v319, 1
        %325 = vmatpush.xpose.msra.mxu0 %v302
        %326 = vmatpush.xpose.msra.mxu0 %v301
        %327 = vmatpush.xpose.msra.mxu0 %v300
        %328 = vmatpush.xpose.msra.mxu0 %v299
        %329 = vmatpush.xpose.msra.mxu0 %v298
        %330 = vmatpush.xpose.msra.mxu0 %v297
        %331 = vmatpush.xpose.msra.mxu0 %v296
        %332 = vmatpush.xpose.msra.mxu0 %v295
        %333 = vmatpush.xpose.msra.mxu0 %v294
        %334 = vmatpush.xpose.msra.mxu0 %v293
        %335 = vmatpush.xpose.msra.mxu0 %v292
        %336 = vmatpush.xpose.msra.mxu0 %v291
        %337 = vmatpush.xpose.msra.mxu0 %v290
        %338 = vmatpush.xpose.msra.mxu0 %v289
        %339 = vmatpush.xpose.msra.mxu0 %v288
        %340 = vmatpush.xpose.msra.mxu0 %v287
        %341 = vmatmul.f32.gmra.mxu0 %v286
        %v342 = vpop.f32.mrf.mxu0
        %v343 = vadd.f32 %v321, %v342
        %344 = vdwg.mxu0
        %345 = vmatpush.xpose.msra.mxu0 %v318
        %346 = vmatpush.xpose.msra.mxu0 %v317
        %347 = vmatpush.xpose.msra.mxu0 %v316
        %348 = vmatpush.xpose.msra.mxu0 %v315
        %349 = vmatpush.xpose.msra.mxu0 %v314
        %350 = vmatpush.xpose.msra.mxu0 %v313
        %351 = vmatpush.xpose.msra.mxu0 %v312
        %352 = vmatpush.xpose.msra.mxu0 %v311
        %353 = vmatpush.xpose.msra.mxu0 %v310
        %354 = vmatpush.xpose.msra.mxu0 %v309
        %355 = vmatpush.xpose.msra.mxu0 %v308
        %356 = vmatpush.xpose.msra.mxu0 %v307
        %357 = vmatpush.xpose.msra.mxu0 %v306
        %358 = vmatpush.xpose.msra.mxu0 %v305
        %359 = vmatpush.xpose.msra.mxu0 %v304
        %360 = vmatpush.xpose.msra.mxu0 %v303
        %361 = vmatmul.f32.gmra.mxu0 %v286
        %v362 = vpop.f32.mrf.mxu0
        %v363 = vadd.f32 %v322, %v362
        %364 = vdwg.mxu0
        %v365 = vld [vmem:[%s238] sm:$0xff]
        %v366 = vld [vmem:[%s238 + $0x8] sm:$0xff]
        %367 = vadd.xlane.f32.xlu0 %v365
        %v368 = vpop.xlane.xlu0 %367
        %369 = vadd.xlane.f32.xlu0 %v366
        %v370 = vpop.xlane.xlu0 %369
        %v371 = vrcp.pop 128.0
        %v372 = vmul.f32 128.0, %v371
        %v373 = vsub.f32 1.0, %v372
        %v374 = vmul.f32 %v371, %v373
        %v375 = vadd.f32 %v371, %v374
        %vm376 = vweird.f32 %v371
        %v377 = vsel %vm376, %v371, %v375
        %v378 = vmul.f32 %v368, %v377
        %v379 = vmul.f32 %v370, %v377
        %v380 = vsub.f32 %v365, %v378
        %v381 = vsub.f32 %v366, %v379
        %v382 = vmul.f32 %v380, %v380
        %v383 = vmul.f32 %v381, %v381
        %384 = vadd.xlane.f32.xlu0 %v382
        %v385 = vpop.xlane.xlu0 %384
        %386 = vadd.xlane.f32.xlu0 %v383
        %v387 = vpop.xlane.xlu0 %386
        %v388 = vmul.f32 %v385, %v377
        %v389 = vmul.f32 %v387, %v377
        %v390 = vadd.f32 %v388, 1e-05
        %v391 = vadd.f32 %v389, 1e-05
        %v392 = vrsqrt.pop %v390
        %v393 = vmul.f32 %v392, %v390
        %v394 = vmul.f32 %v393, %v392
        %v395 = vmul.f32 0.5, %v394
        %v396 = vsub.f32 1.5, %v395
        %v397 = vmul.f32 %v392, %v396
        %vm398 = vweird.f32 %v390
        %vm399 = vweird.f32 %v392
        %vm400 = vmor %vm398, %vm399
        %v401 = vsel %vm400, %v392, %v397
        %v402 = vrsqrt.pop %v391
        %v403 = vmul.f32 %v402, %v391
        %v404 = vmul.f32 %v403, %v402
        %v405 = vmul.f32 0.5, %v404
        %v406 = vsub.f32 1.5, %v405
        %v407 = vmul.f32 %v402, %v406
        %vm408 = vweird.f32 %v391
        %vm409 = vweird.f32 %v402
        %vm410 = vmor %vm408, %vm409
        %v411 = vsel %vm410, %v402, %v407
        %v412 = vmul.f32 %v380, %v401
        %v413 = vmul.f32 %v381, %v411
        %v414 = vperm.slane %v343, 0
        %v415 = vmul.f32 %v412, %v414
        %v416 = vmul.f32 %v413, %v414
        %v417 = vperm.slane %v363, 0
        %v418 = vadd.f32 %v415, %v417
        %v419 = vadd.f32 %v416, %v417
        %420 = vst [vmem:[%s263] sm:$0xff] %v418
        %421 = vst [vmem:[%s263 + $0x8] sm:$0xff] %v419
        %s422 = sand.u32 %s120, 1
        %s423 = scalar_lea.sflag [#allocation4], %s422
        %s424 = sand.u32 %s120, 1
        %s425 = smul.addr %s424, 16
        %s426 = scalar_lea.vmem [#allocation10], %s425
        // Predicated region
        $region53: #{tpu_custom_call.1} parent=35 // pred_check
          %p427 = pneg %p130
        $region54: #{tpu_custom_call.1} parent=35 // pred_check_branch
          %429 = sbr.rel (%p427) target = $region56
        $region55: #{tpu_custom_call.1} parent=35 // pred_region
          %s430 = smul.u32 2, %s23
          %432 = vsyncadd %s423, 0
          %s433 = smul.addr %s430, 8
          %s434 = scalar_lea.hbm %s4, %s433
          %s435 = sshll.u32 %s426, 4
          %s436 = int_to_ptr.vmem [resolvable:$true] %s435
          %s437 = sshll.u32 %s434, 4
          %s438 = int_to_ptr.hbm [resolvable:$true] %s437
          %443 = dma.vmem_to_hbm [thread:$0]  %s436, 256, %s438, %s423, 128, 128, 8
        $region56: #{tpu_custom_call.1} parent=35 // pred_fallthru
          _
      $region36: #{tpu_custom_call.1} parent=5 // pred_fallthru
        _
      %p444 = scmp.le.s32.totalorder 2, %s18
      // Predicated region
      $region57: #{tpu_custom_call.1} parent=5 // pred_check
        %p445 = pneg %p444
      $region58: #{tpu_custom_call.1} parent=5 // pred_check_branch
        %447 = sbr.rel (%p445) target = $region60
      $region59: #{tpu_custom_call.1} parent=5 // pred_region
        %s448 = ssub.s32 %s18, 2
        // Predicated region
        $region61: #{tpu_custom_call.1} parent=59 // pred_check
          %p449 = pneg %p136
        $region62: #{tpu_custom_call.1} parent=59 // pred_check_branch
          %451 = sbr.rel (%p449) target = $region64
        $region63: #{tpu_custom_call.1} parent=59 // pred_region
          %s452 = sand.u32 %s121, 1
          %s453 = scalar_lea.sflag [#allocation4], %s452
          %s454 = sand.u32 %s121, 1
          %s455 = smul.addr %s454, 16
          %s456 = scalar_lea.vmem [#allocation10], %s455
          %458 = dma.done %s453, 256
        $region64: #{tpu_custom_call.1} parent=59 // pred_fallthru
          _
      $region60: #{tpu_custom_call.1} parent=5 // pred_fallthru
        _
    $region6: #{tpu_custom_call.1} parent=1 // loop_footer
      %s22 = sadd.s32 1, %s18
    $region7: #{tpu_custom_call.1} parent=1 // loop_footer_branch
      %17 = sbr.rel target = $region3
    $region8: #{tpu_custom_call.1} parent=1 // loop_exit
      _
    %459 = vsyncpa [#allocation3], 1
    %s460 = scalar_lea.sflag [#allocation3], 1
    %461 = vsyncpa %s460, 1
    %462 = vsyncpa [#allocation6], 1
    %463 = vsyncpa [#allocation9], 1
    %s464 = scalar_lea.sflag [#allocation9], 1
    %465 = vsyncpa %s464, 1
    %466 = vsyncpa [#allocation4], 1
    %s467 = scalar_lea.sflag [#allocation4], 1
    %468 = vsyncpa %s467, 1

</llo_original>
